<compile_context>
chip_gen: v5e
topology: v5e:2x2
jax: 0.10.0
libtpu: 0.0.40
codegen_flags: <defaults>
</compile_context>

<pallas_src>
import functools

import jax
import jax.numpy as jnp
from jax.experimental import pallas as pl
from jax.experimental.pallas import tpu as pltpu


# ----------------------------- small helpers --------------------------------

def _divisors(n):
    return [i for i in range(1, n + 1) if n % i == 0]


def _round_up(x, m):
    return ((x + m - 1) // m) * m


def _sublane_pack(dtype):
    """Sublane packing factor: 8 (f32), 16 (bf16/f16), 32 (int8/fp8)."""
    return max(8, 32 // jnp.dtype(dtype).itemsize)


def _vmem_budget_bytes():
    """~85% of this generation's per-core VMEM (64 MiB fallback == v7x-safe)."""
    try:
        cap = int(pltpu.get_tpu_info().vmem_capacity_bytes)
    except Exception:
        cap = 64 << 20
    return int(0.85 * cap)


def _pick_fold(n, c, max_lanes=2048):
    """Fold k rows of N into lanes when C < 128 so streamed tiles are lane-dense."""
    if c >= 128:
        return 1
    best = 1
    for k in _divisors(n):
        if k * c > max_lanes:
            break
        if (k * c) % 128 == 0:
            return k
        if best == 1 and k * c >= 128:
            best = k
    return best


def _pick_tb(b, per_tb_bytes, budget, prefer_split):
    """Largest divisor of B that is a multiple of 8 (or B itself), fits the
    budget, and -- when possible -- leaves gb >= 2 so both v7x TensorCores get
    a share of the "parallel" B axis."""
    cands = sorted({t for t in _divisors(b) if t % 8 == 0 or t == b})
    fitting = [t for t in cands if t * per_tb_bytes <= budget] or [cands[0]]
    if prefer_split:
        split = [t for t in fitting if b // t >= 2]
        if split:
            return max(split)
    return max(fitting)


def _pick_tn(nk, per_tn_bytes, budget, pack):
    """Largest divisor of Nk that is a multiple of the sublane packing (or Nk
    itself) and fits the remaining VMEM budget."""
    cands = sorted({t for t in _divisors(nk) if t % pack == 0 or t == nk})
    fitting = [t for t in cands if t * per_tn_bytes <= budget]
    return max(fitting) if fitting else cands[0]


def _pipeline_mode_supported():
    try:
        pl.BlockSpec((8, 128), lambda i: (0, 0), pipeline_mode=pl.Buffered(1))
        return True
    except Exception:
        return False


_HAS_PIPELINE_MODE = _pipeline_mode_supported()


# --------------------------------- kernel -----------------------------------

def _spatial_aware_kernel(x_ref, w1_ref, b1_ref, w2_ref, b2_ref, o_ref, acc_ref,
                          *, inv_n, fold, c2p):
    # x_ref : (tb, tn, fold*C)  streamed input tile (N-axis tile j, lane-dense)
    # w1_ref: (C, d*c2p)        layer-1 weights fused over branches (lane-padded)
    # b1_ref: (1, d*c2p)
    # w2_ref: (d, c2p, C)       per-branch layer-2 weights (rows zero-padded)
    # b2_ref: (d, 1, C)
    # o_ref : (d, tb, C)        branch-major output block (written on last N step)
    # acc_ref: (tb, fold*C) f32 running sum over N
    j = pl.program_id(1)

    @pl.when(j == 0)
    def _init():
        acc_ref[...] = jnp.zeros_like(acc_ref)

    # Accumulate the N-reduction directly in f32 (no materialized f32 copy of
    # the tile: keeps bf16 inputs DMA-bound instead of VPU/vreg-bound).
    acc_ref[...] += jnp.sum(x_ref[...], axis=1, dtype=jnp.float32)

    @pl.when(j == pl.num_programs(1) - 1)
    def _finalize():
        d, _, c = w2_ref.shape

        # Undo the small-C lane folding: sum the `fold` groups of C lanes.
        xm = acc_ref[:, 0:c]
        for g in range(1, fold):
            xm = xm + acc_ref[:, g * c:(g + 1) * c]
        xm = xm * inv_n                                      # (tb, C) f32 mean

        # Layer 1, fused across all d branches: one wide MXU matmul.
        h = jnp.dot(xm.astype(w1_ref.dtype), w1_ref[...],
                    preferred_element_type=jnp.float32)
        h = h + b1_ref[...].astype(jnp.float32)              # (tb, d*c2p) f32

        # Layer 2: per-branch (c2p -> C).  d is small; each branch's h chunk is
        # lane-aligned (c2p % 128 == 0) so the slices feed the MXU directly.
        for bi in range(d):
            h_b = h[:, bi * c2p:(bi + 1) * c2p]              # (tb, c2p)
            y_b = jnp.dot(h_b.astype(w2_ref.dtype), w2_ref[bi],
                          preferred_element_type=jnp.float32)
            o_ref[bi] = (y_b + b2_ref[bi].astype(jnp.float32)).astype(o_ref.dtype)


# -------------------------------- wrapper ------------------------------------

def spatial_aware(x, w1, b1, w2, b2):
    """x: (B, N, C); w1: (d, C, C2); b1: (d, C2); w2: (d, C2, C); b2: (d, C).

    Weights are stored already transposed as (in_features, out_features).
    Returns (B, C, d), matching the PyTorch module output.  x may be fed in
    bf16 (halves the HBM traffic of this read-bound kernel); the N-sum and all
    bias adds still accumulate in f32.
    """
    B, N, C = x.shape
    d, _, C2 = w1.shape

    # Pad each branch's C2 chunk to a 128-lane boundary and fuse layer 1 across
    # branches: (d, C, C2) -> (C, d*c2p).  Padded h columns are exactly zero
    # (zero weight columns + zero bias) and padded w2 rows are zero, so the
    # result is unchanged.
    c2p = _round_up(C2, 128)
    pad = c2p - C2
    w1_p = jnp.pad(w1, ((0, 0), (0, 0), (0, pad)))            # (d, C, c2p)
    b1_p = jnp.pad(b1, ((0, 0), (0, pad)))                    # (d, c2p)
    w2_p = jnp.pad(w2, ((0, 0), (0, pad), (0, 0)))            # (d, c2p, C)
    w1_all = jnp.transpose(w1_p, (1, 0, 2)).reshape(C, d * c2p)
    b1_all = b1_p.reshape(1, d * c2p)
    b2_r = b2.reshape(d, 1, C)

    # Lane folding for small C: stream (B, N/k, k*C) (free row-major reshape).
    fold = _pick_fold(N, C)
    Nk, kC = N // fold, fold * C
    x_r = x.reshape(B, Nk, kC)

    xsize = x.dtype.itemsize
    wsize = w1.dtype.itemsize
    osize = x.dtype.itemsize
    weights_bytes = (C * d * c2p + d * c2p + d * c2p * C + d * C) * wsize
    pack = _sublane_pack(x.dtype)
    vmem_cap = _vmem_budget_bytes()
    inv_n = 1.0 / N

    def build(use_pm):
        x_bufs = 3 if use_pm else 2          # triple-buffer the streamed input
        w_bufs = 1 if use_pm else 2          # grid-invariant weights: 1 buffer
        margin = 2 << 20

        # Pick tb first (min-width x tile + output + accumulator per unit tb),
        # then give the remaining budget to tn.
        tb_budget = vmem_cap - w_bufs * weights_bytes - margin
        per_tb = (x_bufs * min(pack, Nk) * kC * xsize
                  + 2 * d * C * osize + kC * 4)
        tb = _pick_tb(B, per_tb, tb_budget, prefer_split=True)

        tn_budget = (vmem_cap - w_bufs * weights_bytes - margin
                     - 2 * d * tb * C * osize - tb * kC * 4)
        per_tn = x_bufs * tb * kC * xsize
        tn = _pick_tn(Nk, per_tn, tn_budget, pack)

        gb, gn = B // tb, Nk // tn
        need = (x_bufs * tb * tn * kC * xsize + w_bufs * weights_bytes
                + 2 * d * tb * C * osize + tb * kC * 4)
        vmem_limit = int(min(vmem_cap, max(need + margin, 16 << 20)))

        def spec(shape, index_map, bufs):
            if use_pm:
                return pl.BlockSpec(shape, index_map,
                                    pipeline_mode=pl.Buffered(bufs))
            return pl.BlockSpec(shape, index_map)

        cost = pl.CostEstimate(
            flops=4 * B * d * C * c2p,
            transcendentals=0,
            bytes_accessed=B * N * C * xsize + weights_bytes + B * d * C * osize,
        )

        return pl.pallas_call(
            functools.partial(_spatial_aware_kernel, inv_n=inv_n, fold=fold,
                              c2p=c2p),
            out_shape=jax.ShapeDtypeStruct((d, B, C), x.dtype),
            grid_spec=pltpu.PrefetchScalarGridSpec(
                num_scalar_prefetch=0,
                # B tiles are independent ("parallel": v7x's two TCs split the
                # work when gb >= 2); N tiles are the mean reduction
                # ("arbitrary", innermost).
                grid=(gb, gn),
                in_specs=[
                    spec((tb, tn, kC), lambda i, j: (i, j, 0), x_bufs),  # streamed x
                    spec((C, d * c2p), lambda i, j: (0, 0), w_bufs),     # resident W1
                    spec((1, d * c2p), lambda i, j: (0, 0), w_bufs),     # resident b1
                    spec((d, c2p, C), lambda i, j: (0, 0, 0), w_bufs),   # resident W2
                    spec((d, 1, C), lambda i, j: (0, 0, 0), w_bufs),     # resident b2
                ],
                out_specs=pl.BlockSpec((d, tb, C), lambda i, j: (0, i, 0)),
                scratch_shapes=[pltpu.VMEM((tb, kC), jnp.float32)],
            ),
            compiler_params=pltpu.CompilerParams(
                dimension_semantics=("parallel", "arbitrary"),
                vmem_limit_bytes=vmem_limit,
            ),
            cost_estimate=cost,
        )

    try:
        out_dbc = build(use_pm=_HAS_PIPELINE_MODE)(x_r, w1_all, b1_all, w2_p, b2_r)
    except Exception:
        # Fall back to default double-buffering if pipeline_mode hints are
        # rejected by this JAX/Mosaic version.
        if not _HAS_PIPELINE_MODE:
            raise
        out_dbc = build(use_pm=False)(x_r, w1_all, b1_all, w2_p, b2_r)

    # Layout glue only: kernel emits branch-major (d, B, C) (C-minor, lane-dense);
    # PyTorch's torch.stack(..., -1) wants (B, C, d).
    # TODO(synk): consumers that can take (d, B, C) / (B, d, C) should skip this
    # transpose -- it is a separate mem-bound XLA op with a d-minor (<128 lane)
    # layout and can cost as much as the kernel's own output writeback.
    return jnp.transpose(out_dbc, (1, 2, 0))


# ----------------------------- test utilities --------------------------------

def init_params(key, c, d):
    """Deterministic init mimicking nn.Linear default (uniform +-1/sqrt(fan_in)).
    Weights are stored already transposed as (in_features, out_features)."""
    c2 = c // 2
    k1, k2, k3, k4 = jax.random.split(key, 4)
    bound1 = 1.0 / float(c) ** 0.5
    bound2 = 1.0 / float(c2) ** 0.5
    w1 = jax.random.uniform(k1, (d, c, c2), jnp.float32, -bound1, bound1)
    b1 = jax.random.uniform(k2, (d, c2), jnp.float32, -bound1, bound1)
    w2 = jax.random.uniform(k3, (d, c2, c), jnp.float32, -bound2, bound2)
    b2 = jax.random.uniform(k4, (d, c), jnp.float32, -bound2, bound2)
    return w1, b1, w2, b2


def reference(x, w1, b1, w2, b2):
    xm = jnp.mean(x, axis=1)                                   # (B, C)
    h = jnp.einsum("bc,dch->bdh", xm, w1) + b1[None]           # (B, d, C2)
    y = jnp.einsum("bdh,dhc->bdc", h, w2) + b2[None]           # (B, d, C)
    return jnp.transpose(y, (0, 2, 1))                         # (B, C, d)


if __name__ == "__main__":
    B, N, C, d = 2, 8, 32, 8
    key = jax.random.PRNGKey(0)
    kx, kp = jax.random.split(key)
    x = jax.random.normal(kx, (B, N, C), jnp.float32)
    w1, b1, w2, b2 = init_params(kp, C, d)

    out = spatial_aware(x, w1, b1, w2, b2)
    jax.block_until_ready(out)

    ref = reference(x, w1, b1, w2, b2)
    assert out.shape == (B, C, d), out.shape
    assert jnp.allclose(out, ref, atol=1e-5, rtol=1e-5), float(jnp.max(jnp.abs(out - ref)))

    print("KERNEL_OK")
</pallas_src>

<mosaic_0001>
module attributes {stable_mosaic.version = 11 : i64} {
  func.func @_spatial_aware_kernel(%arg0: i32, %arg1: i32, %arg2: memref<2x2x128xf32, #tpu.memory_space<vmem>>, %arg3: memref<32x1024xf32, #tpu.memory_space<vmem>>, %arg4: memref<1x1024xf32, #tpu.memory_space<vmem>>, %arg5: memref<8x128x32xf32, #tpu.memory_space<vmem>>, %arg6: memref<8x1x32xf32, #tpu.memory_space<vmem>>, %arg7: memref<8x2x32xf32, #tpu.memory_space<vmem>>, %arg8: memref<2x128xf32, #tpu.memory_space<vmem>>) attributes {dimension_semantics = [#tpu.dimension_semantics<parallel>, #tpu.dimension_semantics<arbitrary>], iteration_bounds = array<i64: 1, 1>, scalar_prefetch = 0 : i64, scratch_operands = 1 : i64, tpu.core_type = #tpu.core_type<tc>, window_params = [{transform_indices = @transform_0, window_bounds = array<i64: 2, 2, 128>}, {pipeline_mode = #tpu.pipeline_mode<synchronous>, transform_indices = @transform_1, window_bounds = array<i64: 32, 1024>}, {pipeline_mode = #tpu.pipeline_mode<synchronous>, transform_indices = @transform_2, window_bounds = array<i64: 1, 1024>}, {pipeline_mode = #tpu.pipeline_mode<synchronous>, transform_indices = @transform_3, window_bounds = array<i64: 8, 128, 32>}, {pipeline_mode = #tpu.pipeline_mode<synchronous>, transform_indices = @transform_4, window_bounds = array<i64: 8, 1, 32>}, {transform_indices = @transform_5, window_bounds = array<i64: 8, 2, 32>}]} {
    %c0_i32 = arith.constant 0 : i32
    %0 = arith.cmpi eq, %arg1, %c0_i32 : i32
    %1 = arith.extui %0 : i1 to i32
    %c0_i32_0 = arith.constant 0 : i32
    %2 = arith.cmpi ne, %1, %c0_i32_0 : i32
    scf.if %2 {
      %cst_9 = arith.constant 0.000000e+00 : f32
      %11 = vector.broadcast %cst_9 : f32 to vector<2x128xf32>
      %c0_10 = arith.constant 0 : index
      %c0_11 = arith.constant 0 : index
      %12 = vector.load %arg8[%c0_10, %c0_11] : memref<2x128xf32, #tpu.memory_space<vmem>>, vector<2x128xf32>
      tpu.vector_store %arg8[%c0_10, %c0_11], %11 {strides = array<i32>} : memref<2x128xf32, #tpu.memory_space<vmem>>, vector<2x128xf32>,
    } else {
    }
    %c0 = arith.constant 0 : index
    %c0_1 = arith.constant 0 : index
    %3 = vector.load %arg8[%c0, %c0_1] : memref<2x128xf32, #tpu.memory_space<vmem>>, vector<2x128xf32>
    %c0_2 = arith.constant 0 : index
    %c0_3 = arith.constant 0 : index
    %c0_4 = arith.constant 0 : index
    %4 = vector.load %arg2[%c0_2, %c0_3, %c0_4] : memref<2x2x128xf32, #tpu.memory_space<vmem>>, vector<2x2x128xf32>
    %cst = arith.constant dense<0.000000e+00> : vector<2x128xf32>
    %5 = vector.multi_reduction <add>, %4, %cst [1] : vector<2x2x128xf32> to vector<2x128xf32>
    %6 = arith.addf %3, %5 : vector<2x128xf32>
    %c0_5 = arith.constant 0 : index
    %c0_6 = arith.constant 0 : index
    %7 = vector.load %arg8[%c0_5, %c0_6] : memref<2x128xf32, #tpu.memory_space<vmem>>, vector<2x128xf32>
    tpu.vector_store %arg8[%c0_5, %c0_6], %6 {strides = array<i32>} : memref<2x128xf32, #tpu.memory_space<vmem>>, vector<2x128xf32>,
    %c0_i32_7 = arith.constant 0 : i32
    %8 = arith.cmpi eq, %arg1, %c0_i32_7 : i32
    %9 = arith.extui %8 : i1 to i32
    %c0_i32_8 = arith.constant 0 : i32
    %10 = arith.cmpi ne, %9, %c0_i32_8 : i32
    scf.if %10 {
      %c0_9 = arith.constant 0 : index
      %c0_10 = arith.constant 0 : index
      %11 = vector.load %arg8[%c0_9, %c0_10] : memref<2x128xf32, #tpu.memory_space<vmem>>, vector<2x32xf32>
      %c0_11 = arith.constant 0 : index
      %c32 = arith.constant 32 : index
      %12 = vector.load %arg8[%c0_11, %c32] : memref<2x128xf32, #tpu.memory_space<vmem>>, vector<2x32xf32>
      %13 = arith.addf %11, %12 : vector<2x32xf32>
      %c0_12 = arith.constant 0 : index
      %c64 = arith.constant 64 : index
      %14 = vector.load %arg8[%c0_12, %c64] : memref<2x128xf32, #tpu.memory_space<vmem>>, vector<2x32xf32>
      %15 = arith.addf %13, %14 : vector<2x32xf32>
      %c0_13 = arith.constant 0 : index
      %c96 = arith.constant 96 : index
      %16 = vector.load %arg8[%c0_13, %c96] : memref<2x128xf32, #tpu.memory_space<vmem>>, vector<2x32xf32>
      %17 = arith.addf %15, %16 : vector<2x32xf32>
      %cst_14 = arith.constant 1.250000e-01 : f32
      %18 = vector.broadcast %cst_14 : f32 to vector<2x32xf32>
      %19 = arith.mulf %17, %18 : vector<2x32xf32>
      %c0_15 = arith.constant 0 : index
      %c0_16 = arith.constant 0 : index
      %20 = vector.load %arg3[%c0_15, %c0_16] : memref<32x1024xf32, #tpu.memory_space<vmem>>, vector<32x1024xf32>
      %cst_17 = arith.constant dense<0.000000e+00> : vector<2x1024xf32>
      %21 = tpu.matmul %19, %20, %cst_17 {dimension_numbers = #tpu.dot_dimension_numbers<[1], [0], [0], [1], [0, 0, 1, 1], [], []>} : vector<2x32xf32>, vector<32x1024xf32>, vector<2x1024xf32> -> vector<2x1024xf32>
      %c0_18 = arith.constant 0 : index
      %c0_19 = arith.constant 0 : index
      %22 = vector.load %arg4[%c0_18, %c0_19] : memref<1x1024xf32, #tpu.memory_space<vmem>>, vector<1x1024xf32>
      %23 = vector.broadcast %22 : vector<1x1024xf32> to vector<2x1024xf32>
      %24 = arith.addf %21, %23 : vector<2x1024xf32>
      %25 = vector.extract_strided_slice %24 {offsets = [0, 0], sizes = [2, 128], strides = [1, 1]} : vector<2x1024xf32> to vector<2x128xf32>
      %c0_20 = arith.constant 0 : index
      %c0_21 = arith.constant 0 : index
      %c0_22 = arith.constant 0 : index
      %26 = vector.load %arg5[%c0_20, %c0_21, %c0_22] : memref<8x128x32xf32, #tpu.memory_space<vmem>>, vector<1x128x32xf32>
      %27 = vector.shape_cast %26 : vector<1x128x32xf32> to vector<128x32xf32>
      %cst_23 = arith.constant dense<0.000000e+00> : vector<2x32xf32>
      %28 = tpu.matmul %25, %27, %cst_23 {dimension_numbers = #tpu.dot_dimension_numbers<[1], [0], [0], [1], [0, 0, 1, 1], [], []>} : vector<2x128xf32>, vector<128x32xf32>, vector<2x32xf32> -> vector<2x32xf32>
      %c0_24 = arith.constant 0 : index
      %c0_25 = arith.constant 0 : index
      %c0_26 = arith.constant 0 : index
      %29 = vector.load %arg6[%c0_24, %c0_25, %c0_26] : memref<8x1x32xf32, #tpu.memory_space<vmem>>, vector<1x1x32xf32>
      %30 = vector.shape_cast %29 : vector<1x1x32xf32> to vector<1x32xf32>
      %31 = vector.broadcast %30 : vector<1x32xf32> to vector<2x32xf32>
      %32 = arith.addf %28, %31 : vector<2x32xf32>
      %c0_27 = arith.constant 0 : index
      %c0_28 = arith.constant 0 : index
      %c0_29 = arith.constant 0 : index
      %33 = vector.load %arg7[%c0_27, %c0_28, %c0_29] : memref<8x2x32xf32, #tpu.memory_space<vmem>>, vector<1x2x32xf32>
      %34 = vector.shape_cast %33 : vector<1x2x32xf32> to vector<2x32xf32>
      %35 = vector.shape_cast %32 : vector<2x32xf32> to vector<1x2x32xf32>
      tpu.vector_store %arg7[%c0_27, %c0_28, %c0_29], %35 {strides = array<i32>} : memref<8x2x32xf32, #tpu.memory_space<vmem>>, vector<1x2x32xf32>,
      %36 = vector.extract_strided_slice %24 {offsets = [0, 128], sizes = [2, 128], strides = [1, 1]} : vector<2x1024xf32> to vector<2x128xf32>
      %c1 = arith.constant 1 : index
      %c0_30 = arith.constant 0 : index
      %c0_31 = arith.constant 0 : index
      %37 = vector.load %arg5[%c1, %c0_30, %c0_31] : memref<8x128x32xf32, #tpu.memory_space<vmem>>, vector<1x128x32xf32>
      %38 = vector.shape_cast %37 : vector<1x128x32xf32> to vector<128x32xf32>
      %cst_32 = arith.constant dense<0.000000e+00> : vector<2x32xf32>
      %39 = tpu.matmul %36, %38, %cst_32 {dimension_numbers = #tpu.dot_dimension_numbers<[1], [0], [0], [1], [0, 0, 1, 1], [], []>} : vector<2x128xf32>, vector<128x32xf32>, vector<2x32xf32> -> vector<2x32xf32>
      %c1_33 = arith.constant 1 : index
      %c0_34 = arith.constant 0 : index
      %c0_35 = arith.constant 0 : index
      %40 = vector.load %arg6[%c1_33, %c0_34, %c0_35] : memref<8x1x32xf32, #tpu.memory_space<vmem>>, vector<1x1x32xf32>
      %41 = vector.shape_cast %40 : vector<1x1x32xf32> to vector<1x32xf32>
      %42 = vector.broadcast %41 : vector<1x32xf32> to vector<2x32xf32>
      %43 = arith.addf %39, %42 : vector<2x32xf32>
      %c1_36 = arith.constant 1 : index
      %c0_37 = arith.constant 0 : index
      %c0_38 = arith.constant 0 : index
      %44 = vector.load %arg7[%c1_36, %c0_37, %c0_38] : memref<8x2x32xf32, #tpu.memory_space<vmem>>, vector<1x2x32xf32>
      %45 = vector.shape_cast %44 : vector<1x2x32xf32> to vector<2x32xf32>
      %46 = vector.shape_cast %43 : vector<2x32xf32> to vector<1x2x32xf32>
      tpu.vector_store %arg7[%c1_36, %c0_37, %c0_38], %46 {strides = array<i32>} : memref<8x2x32xf32, #tpu.memory_space<vmem>>, vector<1x2x32xf32>,
      %47 = vector.extract_strided_slice %24 {offsets = [0, 256], sizes = [2, 128], strides = [1, 1]} : vector<2x1024xf32> to vector<2x128xf32>
      %c2 = arith.constant 2 : index
      %c0_39 = arith.constant 0 : index
      %c0_40 = arith.constant 0 : index
      %48 = vector.load %arg5[%c2, %c0_39, %c0_40] : memref<8x128x32xf32, #tpu.memory_space<vmem>>, vector<1x128x32xf32>
      %49 = vector.shape_cast %48 : vector<1x128x32xf32> to vector<128x32xf32>
      %cst_41 = arith.constant dense<0.000000e+00> : vector<2x32xf32>
      %50 = tpu.matmul %47, %49, %cst_41 {dimension_numbers = #tpu.dot_dimension_numbers<[1], [0], [0], [1], [0, 0, 1, 1], [], []>} : vector<2x128xf32>, vector<128x32xf32>, vector<2x32xf32> -> vector<2x32xf32>
      %c2_42 = arith.constant 2 : index
      %c0_43 = arith.constant 0 : index
      %c0_44 = arith.constant 0 : index
      %51 = vector.load %arg6[%c2_42, %c0_43, %c0_44] : memref<8x1x32xf32, #tpu.memory_space<vmem>>, vector<1x1x32xf32>
      %52 = vector.shape_cast %51 : vector<1x1x32xf32> to vector<1x32xf32>
      %53 = vector.broadcast %52 : vector<1x32xf32> to vector<2x32xf32>
      %54 = arith.addf %50, %53 : vector<2x32xf32>
      %c2_45 = arith.constant 2 : index
      %c0_46 = arith.constant 0 : index
      %c0_47 = arith.constant 0 : index
      %55 = vector.load %arg7[%c2_45, %c0_46, %c0_47] : memref<8x2x32xf32, #tpu.memory_space<vmem>>, vector<1x2x32xf32>
      %56 = vector.shape_cast %55 : vector<1x2x32xf32> to vector<2x32xf32>
      %57 = vector.shape_cast %54 : vector<2x32xf32> to vector<1x2x32xf32>
      tpu.vector_store %arg7[%c2_45, %c0_46, %c0_47], %57 {strides = array<i32>} : memref<8x2x32xf32, #tpu.memory_space<vmem>>, vector<1x2x32xf32>,
      %58 = vector.extract_strided_slice %24 {offsets = [0, 384], sizes = [2, 128], strides = [1, 1]} : vector<2x1024xf32> to vector<2x128xf32>
      %c3 = arith.constant 3 : index
      %c0_48 = arith.constant 0 : index
      %c0_49 = arith.constant 0 : index
      %59 = vector.load %arg5[%c3, %c0_48, %c0_49] : memref<8x128x32xf32, #tpu.memory_space<vmem>>, vector<1x128x32xf32>
      %60 = vector.shape_cast %59 : vector<1x128x32xf32> to vector<128x32xf32>
      %cst_50 = arith.constant dense<0.000000e+00> : vector<2x32xf32>
      %61 = tpu.matmul %58, %60, %cst_50 {dimension_numbers = #tpu.dot_dimension_numbers<[1], [0], [0], [1], [0, 0, 1, 1], [], []>} : vector<2x128xf32>, vector<128x32xf32>, vector<2x32xf32> -> vector<2x32xf32>
      %c3_51 = arith.constant 3 : index
      %c0_52 = arith.constant 0 : index
      %c0_53 = arith.constant 0 : index
      %62 = vector.load %arg6[%c3_51, %c0_52, %c0_53] : memref<8x1x32xf32, #tpu.memory_space<vmem>>, vector<1x1x32xf32>
      %63 = vector.shape_cast %62 : vector<1x1x32xf32> to vector<1x32xf32>
      %64 = vector.broadcast %63 : vector<1x32xf32> to vector<2x32xf32>
      %65 = arith.addf %61, %64 : vector<2x32xf32>
      %c3_54 = arith.constant 3 : index
      %c0_55 = arith.constant 0 : index
      %c0_56 = arith.constant 0 : index
      %66 = vector.load %arg7[%c3_54, %c0_55, %c0_56] : memref<8x2x32xf32, #tpu.memory_space<vmem>>, vector<1x2x32xf32>
      %67 = vector.shape_cast %66 : vector<1x2x32xf32> to vector<2x32xf32>
      %68 = vector.shape_cast %65 : vector<2x32xf32> to vector<1x2x32xf32>
      tpu.vector_store %arg7[%c3_54, %c0_55, %c0_56], %68 {strides = array<i32>} : memref<8x2x32xf32, #tpu.memory_space<vmem>>, vector<1x2x32xf32>,
      %69 = vector.extract_strided_slice %24 {offsets = [0, 512], sizes = [2, 128], strides = [1, 1]} : vector<2x1024xf32> to vector<2x128xf32>
      %c4 = arith.constant 4 : index
      %c0_57 = arith.constant 0 : index
      %c0_58 = arith.constant 0 : index
      %70 = vector.load %arg5[%c4, %c0_57, %c0_58] : memref<8x128x32xf32, #tpu.memory_space<vmem>>, vector<1x128x32xf32>
      %71 = vector.shape_cast %70 : vector<1x128x32xf32> to vector<128x32xf32>
      %cst_59 = arith.constant dense<0.000000e+00> : vector<2x32xf32>
      %72 = tpu.matmul %69, %71, %cst_59 {dimension_numbers = #tpu.dot_dimension_numbers<[1], [0], [0], [1], [0, 0, 1, 1], [], []>} : vector<2x128xf32>, vector<128x32xf32>, vector<2x32xf32> -> vector<2x32xf32>
      %c4_60 = arith.constant 4 : index
      %c0_61 = arith.constant 0 : index
      %c0_62 = arith.constant 0 : index
      %73 = vector.load %arg6[%c4_60, %c0_61, %c0_62] : memref<8x1x32xf32, #tpu.memory_space<vmem>>, vector<1x1x32xf32>
      %74 = vector.shape_cast %73 : vector<1x1x32xf32> to vector<1x32xf32>
      %75 = vector.broadcast %74 : vector<1x32xf32> to vector<2x32xf32>
      %76 = arith.addf %72, %75 : vector<2x32xf32>
      %c4_63 = arith.constant 4 : index
      %c0_64 = arith.constant 0 : index
      %c0_65 = arith.constant 0 : index
      %77 = vector.load %arg7[%c4_63, %c0_64, %c0_65] : memref<8x2x32xf32, #tpu.memory_space<vmem>>, vector<1x2x32xf32>
      %78 = vector.shape_cast %77 : vector<1x2x32xf32> to vector<2x32xf32>
      %79 = vector.shape_cast %76 : vector<2x32xf32> to vector<1x2x32xf32>
      tpu.vector_store %arg7[%c4_63, %c0_64, %c0_65], %79 {strides = array<i32>} : memref<8x2x32xf32, #tpu.memory_space<vmem>>, vector<1x2x32xf32>,
      %80 = vector.extract_strided_slice %24 {offsets = [0, 640], sizes = [2, 128], strides = [1, 1]} : vector<2x1024xf32> to vector<2x128xf32>
      %c5 = arith.constant 5 : index
      %c0_66 = arith.constant 0 : index
      %c0_67 = arith.constant 0 : index
      %81 = vector.load %arg5[%c5, %c0_66, %c0_67] : memref<8x128x32xf32, #tpu.memory_space<vmem>>, vector<1x128x32xf32>
      %82 = vector.shape_cast %81 : vector<1x128x32xf32> to vector<128x32xf32>
      %cst_68 = arith.constant dense<0.000000e+00> : vector<2x32xf32>
      %83 = tpu.matmul %80, %82, %cst_68 {dimension_numbers = #tpu.dot_dimension_numbers<[1], [0], [0], [1], [0, 0, 1, 1], [], []>} : vector<2x128xf32>, vector<128x32xf32>, vector<2x32xf32> -> vector<2x32xf32>
      %c5_69 = arith.constant 5 : index
      %c0_70 = arith.constant 0 : index
      %c0_71 = arith.constant 0 : index
      %84 = vector.load %arg6[%c5_69, %c0_70, %c0_71] : memref<8x1x32xf32, #tpu.memory_space<vmem>>, vector<1x1x32xf32>
      %85 = vector.shape_cast %84 : vector<1x1x32xf32> to vector<1x32xf32>
      %86 = vector.broadcast %85 : vector<1x32xf32> to vector<2x32xf32>
      %87 = arith.addf %83, %86 : vector<2x32xf32>
      %c5_72 = arith.constant 5 : index
      %c0_73 = arith.constant 0 : index
      %c0_74 = arith.constant 0 : index
      %88 = vector.load %arg7[%c5_72, %c0_73, %c0_74] : memref<8x2x32xf32, #tpu.memory_space<vmem>>, vector<1x2x32xf32>
      %89 = vector.shape_cast %88 : vector<1x2x32xf32> to vector<2x32xf32>
      %90 = vector.shape_cast %87 : vector<2x32xf32> to vector<1x2x32xf32>
      tpu.vector_store %arg7[%c5_72, %c0_73, %c0_74], %90 {strides = array<i32>} : memref<8x2x32xf32, #tpu.memory_space<vmem>>, vector<1x2x32xf32>,
      %91 = vector.extract_strided_slice %24 {offsets = [0, 768], sizes = [2, 128], strides = [1, 1]} : vector<2x1024xf32> to vector<2x128xf32>
      %c6 = arith.constant 6 : index
      %c0_75 = arith.constant 0 : index
      %c0_76 = arith.constant 0 : index
      %92 = vector.load %arg5[%c6, %c0_75, %c0_76] : memref<8x128x32xf32, #tpu.memory_space<vmem>>, vector<1x128x32xf32>
      %93 = vector.shape_cast %92 : vector<1x128x32xf32> to vector<128x32xf32>
      %cst_77 = arith.constant dense<0.000000e+00> : vector<2x32xf32>
      %94 = tpu.matmul %91, %93, %cst_77 {dimension_numbers = #tpu.dot_dimension_numbers<[1], [0], [0], [1], [0, 0, 1, 1], [], []>} : vector<2x128xf32>, vector<128x32xf32>, vector<2x32xf32> -> vector<2x32xf32>
      %c6_78 = arith.constant 6 : index
      %c0_79 = arith.constant 0 : index
      %c0_80 = arith.constant 0 : index
      %95 = vector.load %arg6[%c6_78, %c0_79, %c0_80] : memref<8x1x32xf32, #tpu.memory_space<vmem>>, vector<1x1x32xf32>
      %96 = vector.shape_cast %95 : vector<1x1x32xf32> to vector<1x32xf32>
      %97 = vector.broadcast %96 : vector<1x32xf32> to vector<2x32xf32>
      %98 = arith.addf %94, %97 : vector<2x32xf32>
      %c6_81 = arith.constant 6 : index
      %c0_82 = arith.constant 0 : index
      %c0_83 = arith.constant 0 : index
      %99 = vector.load %arg7[%c6_81, %c0_82, %c0_83] : memref<8x2x32xf32, #tpu.memory_space<vmem>>, vector<1x2x32xf32>
      %100 = vector.shape_cast %99 : vector<1x2x32xf32> to vector<2x32xf32>
      %101 = vector.shape_cast %98 : vector<2x32xf32> to vector<1x2x32xf32>
      tpu.vector_store %arg7[%c6_81, %c0_82, %c0_83], %101 {strides = array<i32>} : memref<8x2x32xf32, #tpu.memory_space<vmem>>, vector<1x2x32xf32>,
      %102 = vector.extract_strided_slice %24 {offsets = [0, 896], sizes = [2, 128], strides = [1, 1]} : vector<2x1024xf32> to vector<2x128xf32>
      %c7 = arith.constant 7 : index
      %c0_84 = arith.constant 0 : index
      %c0_85 = arith.constant 0 : index
      %103 = vector.load %arg5[%c7, %c0_84, %c0_85] : memref<8x128x32xf32, #tpu.memory_space<vmem>>, vector<1x128x32xf32>
      %104 = vector.shape_cast %103 : vector<1x128x32xf32> to vector<128x32xf32>
      %cst_86 = arith.constant dense<0.000000e+00> : vector<2x32xf32>
      %105 = tpu.matmul %102, %104, %cst_86 {dimension_numbers = #tpu.dot_dimension_numbers<[1], [0], [0], [1], [0, 0, 1, 1], [], []>} : vector<2x128xf32>, vector<128x32xf32>, vector<2x32xf32> -> vector<2x32xf32>
      %c7_87 = arith.constant 7 : index
      %c0_88 = arith.constant 0 : index
      %c0_89 = arith.constant 0 : index
      %106 = vector.load %arg6[%c7_87, %c0_88, %c0_89] : memref<8x1x32xf32, #tpu.memory_space<vmem>>, vector<1x1x32xf32>
      %107 = vector.shape_cast %106 : vector<1x1x32xf32> to vector<1x32xf32>
      %108 = vector.broadcast %107 : vector<1x32xf32> to vector<2x32xf32>
      %109 = arith.addf %105, %108 : vector<2x32xf32>
      %c7_90 = arith.constant 7 : index
      %c0_91 = arith.constant 0 : index
      %c0_92 = arith.constant 0 : index
      %110 = vector.load %arg7[%c7_90, %c0_91, %c0_92] : memref<8x2x32xf32, #tpu.memory_space<vmem>>, vector<1x2x32xf32>
      %111 = vector.shape_cast %110 : vector<1x2x32xf32> to vector<2x32xf32>
      %112 = vector.shape_cast %109 : vector<2x32xf32> to vector<1x2x32xf32>
      tpu.vector_store %arg7[%c7_90, %c0_91, %c0_92], %112 {strides = array<i32>} : memref<8x2x32xf32, #tpu.memory_space<vmem>>, vector<1x2x32xf32>,
    } else {
    }
    return
  }
  func.func @transform_0(%arg0: i32, %arg1: i32) -> (i32, i32, i32) {
    %c0_i32 = arith.constant 0 : i32
    %c0_i32_0 = arith.constant 0 : i32
    return %arg0, %arg1, %c0_i32 : i32, i32, i32
  }
  func.func @transform_1(%arg0: i32, %arg1: i32) -> (i32, i32) {
    %c0_i32 = arith.constant 0 : i32
    %c0_i32_0 = arith.constant 0 : i32
    %c0_i32_1 = arith.constant 0 : i32
    return %c0_i32, %c0_i32_0 : i32, i32
  }
  func.func @transform_2(%arg0: i32, %arg1: i32) -> (i32, i32) {
    %c0_i32 = arith.constant 0 : i32
    %c0_i32_0 = arith.constant 0 : i32
    %c0_i32_1 = arith.constant 0 : i32
    return %c0_i32, %c0_i32_0 : i32, i32
  }
  func.func @transform_3(%arg0: i32, %arg1: i32) -> (i32, i32, i32) {
    %c0_i32 = arith.constant 0 : i32
    %c0_i32_0 = arith.constant 0 : i32
    %c0_i32_1 = arith.constant 0 : i32
    %c0_i32_2 = arith.constant 0 : i32
    return %c0_i32, %c0_i32_0, %c0_i32_1 : i32, i32, i32
  }
  func.func @transform_4(%arg0: i32, %arg1: i32) -> (i32, i32, i32) {
    %c0_i32 = arith.constant 0 : i32
    %c0_i32_0 = arith.constant 0 : i32
    %c0_i32_1 = arith.constant 0 : i32
    %c0_i32_2 = arith.constant 0 : i32
    return %c0_i32, %c0_i32_0, %c0_i32_1 : i32, i32, i32
  }
  func.func @transform_5(%arg0: i32, %arg1: i32) -> (i32, i32, i32) {
    %c0_i32 = arith.constant 0 : i32
    %c0_i32_0 = arith.constant 0 : i32
    %c0_i32_1 = arith.constant 0 : i32
    return %c0_i32, %arg0, %c0_i32_0 : i32, i32, i32
  }
}

</mosaic_0001>

<llo_original>
// kernel: tpu_custom_call.1
$region0: #{tpu_custom_call.1}
  #allocation0 [shape = 'u32[]', space=smem, size = 0x4, offset = 0x4, fixed_abs, tag = 'smem constant byte address 0x4 - core index']
  #allocation1 [shape = 'u32[72,128]{1,0:T(1,128)}', space=vmem, size = 0x9000, scoped, tag = 'internal scratch']
  #allocation2 [shape = 'f32[2,128]{1,0:T(2,128)}', space=vmem, size = 0x400, scoped, tag = 'scratch operand']
  %s0 = inlined_call_operand.vmem [shape: f32[2,2,128], index: 0, kind: input, shape index: {}]
  %s1 = inlined_call_operand.vmem [shape: f32[32,1024], index: 1, kind: input, shape index: {}]
  %s2 = inlined_call_operand.vmem [shape: f32[1,1024], index: 2, kind: input, shape index: {}]
  %s3 = inlined_call_operand.vmem [shape: f32[8,128,32], index: 3, kind: input, shape index: {}]
  %s4 = inlined_call_operand.vmem [shape: f32[8,1,32], index: 4, kind: input, shape index: {}]
  %s5 = inlined_call_operand.hbm [shape: f32[8,2,32], index: 5, kind: output, shape index: {}]
  %s6 = sld [smem:[#allocation0]]
  $region38: #{tpu_custom_call.1} parent=0
    _
  %s8 = ssub.s32 1, %s6
  %s9 = scalar_select 0, %s8, %s6
  $region1: #{tpu_custom_call.1} parent=0
    #allocation3 [shape = 'u8[8192]{0}', space=vmem, size = 0x2000, scoped, tag = 'output window, operand 0, single buffered']
    #allocation4 [shape = 's32[1]{0}', space=sflag, size = 0x4, scoped, tag = 'scoped memory for tpu_custom_call.1']
    %10 = vsyncpa [#allocation4], 0
    // Predicated region
    $region2: #{tpu_custom_call.1} parent=1 // pred_check
      _
    $region3: #{tpu_custom_call.1} parent=1 // pred_check_branch
      %12 = sbr.rel (0) target = $region5
    $region4: #{tpu_custom_call.1} parent=1 // pred_region
      _
    $region5: #{tpu_custom_call.1} parent=1 // pred_fallthru
      _
    // Predicated region
    $region6: #{tpu_custom_call.1} parent=1 // pred_check
      _
    $region7: #{tpu_custom_call.1} parent=1 // pred_check_branch
      %14 = sbr.rel (0) target = $region9
    $region8: #{tpu_custom_call.1} parent=1 // pred_region
      _
    $region9: #{tpu_custom_call.1} parent=1 // pred_fallthru
      _
    // Predicated region
    $region10: #{tpu_custom_call.1} parent=1 // pred_check
      _
    $region11: #{tpu_custom_call.1} parent=1 // pred_check_branch
      %16 = sbr.rel (0) target = $region13
    $region12: #{tpu_custom_call.1} parent=1 // pred_region
      _
    $region13: #{tpu_custom_call.1} parent=1 // pred_fallthru
      _
    // Predicated region
    $region14: #{tpu_custom_call.1} parent=1 // pred_check
      _
    $region15: #{tpu_custom_call.1} parent=1 // pred_check_branch
      %18 = sbr.rel (0) target = $region17
    $region16: #{tpu_custom_call.1} parent=1 // pred_region
      _
    $region17: #{tpu_custom_call.1} parent=1 // pred_fallthru
      _
    // Predicated region
    $region18: #{tpu_custom_call.1} parent=1 // pred_check
      _
    $region19: #{tpu_custom_call.1} parent=1 // pred_check_branch
      %20 = sbr.rel (0) target = $region21
    $region20: #{tpu_custom_call.1} parent=1 // pred_region
      _
    $region21: #{tpu_custom_call.1} parent=1 // pred_fallthru
      _
    %p21 = scmp.eq.s32.totalorder 0, 0
    // Predicated region
    $region22: #{tpu_custom_call.1} parent=1 // pred_check
      %p22 = pneg %p21
    $region23: #{tpu_custom_call.1} parent=1 // pred_check_branch
      %24 = sbr.rel (%p22) target = $region25
    $region24: #{tpu_custom_call.1} parent=1 // pred_region
      %25 = vst [vmem:[#allocation2] sm:$0x3] 0.0
    $region25: #{tpu_custom_call.1} parent=1 // pred_fallthru
      _
    %v26 = vld [vmem:[#allocation2] sm:$0x3]
    %v27 = vld [vmem:[%s0] sm:$0x3]
    %v28 = vld [vmem:[%s0 + $0x2] sm:$0x3]
    %vm29 = vcmask 1041408
    %v30 = vsel %vm29, %v27, 0.0
    %v31 = vrot.slane %v30, 4
    %v32 = vadd.f32 %v30, %v31
    %v33 = vrot.slane %v32, 2
    %v34 = vadd.f32 %v32, %v33
    %v35 = vrot.slane %v34, 1
    %v36 = vadd.f32 %v34, %v35
    %v37 = vsel %vm29, %v28, 0.0
    %v38 = vrot.slane %v37, 4
    %v39 = vadd.f32 %v37, %v38
    %v40 = vrot.slane %v39, 2
    %v41 = vadd.f32 %v39, %v40
    %v42 = vrot.slane %v41, 1
    %v43 = vadd.f32 %v41, %v42
    %vm46 = vcmask 1041409
    %v47 = vsel %vm46, %v43, %v36
    %v49 = vadd.f32 %v26, %v47
    %50 = vst [vmem:[#allocation2] sm:$0x3] %v49
    // Predicated region
    $region26: #{tpu_custom_call.1} parent=1 // pred_check
      %p51 = pneg %p21
    $region27: #{tpu_custom_call.1} parent=1 // pred_check_branch
      %53 = sbr.rel (%p51) target = $region29
    $region28: #{tpu_custom_call.1} parent=1 // pred_region
      %v54 = vld [vmem:[#allocation2] sm:$0x3]
      %56 = vrot.lane.b32.xlu0 %v54, 96
      %v57 = vpop.permute.xlu0 %56
      %v59 = vadd.f32 %v54, %v57
      %60 = vrot.lane.b32.xlu0 %v54, 64
      %v61 = vpop.permute.xlu0 %60
      %v63 = vadd.f32 %v59, %v61
      %64 = vrot.lane.b32.xlu0 %v54, 32
      %v65 = vpop.permute.xlu0 %64
      %v67 = vadd.f32 %v63, %v65
      %v68 = vmul.f32 %v67, 0.125
      %v69 = vld [vmem:[%s1] sm:$0xff]
      %v70 = vld [vmem:[%s1 + $0x8] sm:$0xff]
      %v71 = vld [vmem:[%s1 + $0x10] sm:$0xff]
      %v72 = vld [vmem:[%s1 + $0x18] sm:$0xff]
      %v73 = vld [vmem:[%s1 + $0x20] sm:$0xff]
      %v74 = vld [vmem:[%s1 + $0x28] sm:$0xff]
      %v75 = vld [vmem:[%s1 + $0x30] sm:$0xff]
      %v76 = vld [vmem:[%s1 + $0x38] sm:$0xff]
      %v77 = vld [vmem:[%s1 + $0x40] sm:$0xff]
      %v78 = vld [vmem:[%s1 + $0x48] sm:$0xff]
      %v79 = vld [vmem:[%s1 + $0x50] sm:$0xff]
      %v80 = vld [vmem:[%s1 + $0x58] sm:$0xff]
      %v81 = vld [vmem:[%s1 + $0x60] sm:$0xff]
      %v82 = vld [vmem:[%s1 + $0x68] sm:$0xff]
      %v83 = vld [vmem:[%s1 + $0x70] sm:$0xff]
      %v84 = vld [vmem:[%s1 + $0x78] sm:$0xff]
      %v85 = vld [vmem:[%s1 + $0x80] sm:$0xff]
      %v86 = vld [vmem:[%s1 + $0x88] sm:$0xff]
      %v87 = vld [vmem:[%s1 + $0x90] sm:$0xff]
      %v88 = vld [vmem:[%s1 + $0x98] sm:$0xff]
      %v89 = vld [vmem:[%s1 + $0xa0] sm:$0xff]
      %v90 = vld [vmem:[%s1 + $0xa8] sm:$0xff]
      %v91 = vld [vmem:[%s1 + $0xb0] sm:$0xff]
      %v92 = vld [vmem:[%s1 + $0xb8] sm:$0xff]
      %v93 = vld [vmem:[%s1 + $0xc0] sm:$0xff]
      %v94 = vld [vmem:[%s1 + $0xc8] sm:$0xff]
      %v95 = vld [vmem:[%s1 + $0xd0] sm:$0xff]
      %v96 = vld [vmem:[%s1 + $0xd8] sm:$0xff]
      %v97 = vld [vmem:[%s1 + $0xe0] sm:$0xff]
      %v98 = vld [vmem:[%s1 + $0xe8] sm:$0xff]
      %v99 = vld [vmem:[%s1 + $0xf0] sm:$0xff]
      %v100 = vld [vmem:[%s1 + $0xf8] sm:$0xff]
      %v101 = vld [vmem:[%s2] sm:$0xff]
      %v103 = vperm.slane %v101, 0
      %v104 = vperm.slane %v101, 1
      %v105 = vperm.slane %v101, 2
      %v106 = vperm.slane %v101, 3
      %v107 = vperm.slane %v101, 4
      %v108 = vperm.slane %v101, 5
      %v109 = vperm.slane %v101, 6
      %v110 = vperm.slane %v101, 7
      %vm119 = vcmask 261120
      %v121 = vsel %vm119, %v68, 0
      %123 = vmatpush.msra.mxu0 0.0
      %124 = vmatpush.msra.mxu0 0.0
      %125 = vmatpush.msra.mxu0 0.0
      %126 = vmatpush.msra.mxu0 0.0
      %127 = vmatpush.msra.mxu0 0.0
      %128 = vmatpush.msra.mxu0 0.0
      %129 = vmatpush.msra.mxu0 0.0
      %130 = vmatpush.msra.mxu0 0.0
      %131 = vmatpush.msra.mxu0 0.0
      %132 = vmatpush.msra.mxu0 0.0
      %133 = vmatpush.msra.mxu0 0.0
      %134 = vmatpush.msra.mxu0 0.0
      %135 = vmatpush.msra.mxu0 %v93
      %136 = vmatpush.msra.mxu0 %v85
      %137 = vmatpush.msra.mxu0 %v77
      %138 = vmatpush.msra.mxu0 %v69
      %139 = vmatmul.f32.gmra.mxu0 %v121
      %v140 = vpop.f32.mrf.mxu0
      %v141 = vadd.f32 %v103, %v140
      %142 = vdwg.mxu0
      %143 = vmatpush.msra.mxu0 0.0
      %144 = vmatpush.msra.mxu0 0.0
      %145 = vmatpush.msra.mxu0 0.0
      %146 = vmatpush.msra.mxu0 0.0
      %147 = vmatpush.msra.mxu0 0.0
      %148 = vmatpush.msra.mxu0 0.0
      %149 = vmatpush.msra.mxu0 0.0
      %150 = vmatpush.msra.mxu0 0.0
      %151 = vmatpush.msra.mxu0 0.0
      %152 = vmatpush.msra.mxu0 0.0
      %153 = vmatpush.msra.mxu0 0.0
      %154 = vmatpush.msra.mxu0 0.0
      %155 = vmatpush.msra.mxu0 %v94
      %156 = vmatpush.msra.mxu0 %v86
      %157 = vmatpush.msra.mxu0 %v78
      %158 = vmatpush.msra.mxu0 %v70
      %159 = vmatmul.f32.gmra.mxu0 %v121
      %v160 = vpop.f32.mrf.mxu0
      %v161 = vadd.f32 %v104, %v160
      %162 = vdwg.mxu0
      %163 = vmatpush.msra.mxu0 0.0
      %164 = vmatpush.msra.mxu0 0.0
      %165 = vmatpush.msra.mxu0 0.0
      %166 = vmatpush.msra.mxu0 0.0
      %167 = vmatpush.msra.mxu0 0.0
      %168 = vmatpush.msra.mxu0 0.0
      %169 = vmatpush.msra.mxu0 0.0
      %170 = vmatpush.msra.mxu0 0.0
      %171 = vmatpush.msra.mxu0 0.0
      %172 = vmatpush.msra.mxu0 0.0
      %173 = vmatpush.msra.mxu0 0.0
      %174 = vmatpush.msra.mxu0 0.0
      %175 = vmatpush.msra.mxu0 %v95
      %176 = vmatpush.msra.mxu0 %v87
      %177 = vmatpush.msra.mxu0 %v79
      %178 = vmatpush.msra.mxu0 %v71
      %179 = vmatmul.f32.gmra.mxu0 %v121
      %v180 = vpop.f32.mrf.mxu0
      %v181 = vadd.f32 %v105, %v180
      %182 = vdwg.mxu0
      %183 = vmatpush.msra.mxu0 0.0
      %184 = vmatpush.msra.mxu0 0.0
      %185 = vmatpush.msra.mxu0 0.0
      %186 = vmatpush.msra.mxu0 0.0
      %187 = vmatpush.msra.mxu0 0.0
      %188 = vmatpush.msra.mxu0 0.0
      %189 = vmatpush.msra.mxu0 0.0
      %190 = vmatpush.msra.mxu0 0.0
      %191 = vmatpush.msra.mxu0 0.0
      %192 = vmatpush.msra.mxu0 0.0
      %193 = vmatpush.msra.mxu0 0.0
      %194 = vmatpush.msra.mxu0 0.0
      %195 = vmatpush.msra.mxu0 %v96
      %196 = vmatpush.msra.mxu0 %v88
      %197 = vmatpush.msra.mxu0 %v80
      %198 = vmatpush.msra.mxu0 %v72
      %199 = vmatmul.f32.gmra.mxu0 %v121
      %v200 = vpop.f32.mrf.mxu0
      %v201 = vadd.f32 %v106, %v200
      %202 = vdwg.mxu0
      %203 = vmatpush.msra.mxu0 0.0
      %204 = vmatpush.msra.mxu0 0.0
      %205 = vmatpush.msra.mxu0 0.0
      %206 = vmatpush.msra.mxu0 0.0
      %207 = vmatpush.msra.mxu0 0.0
      %208 = vmatpush.msra.mxu0 0.0
      %209 = vmatpush.msra.mxu0 0.0
      %210 = vmatpush.msra.mxu0 0.0
      %211 = vmatpush.msra.mxu0 0.0
      %212 = vmatpush.msra.mxu0 0.0
      %213 = vmatpush.msra.mxu0 0.0
      %214 = vmatpush.msra.mxu0 0.0
      %215 = vmatpush.msra.mxu0 %v97
      %216 = vmatpush.msra.mxu0 %v89
      %217 = vmatpush.msra.mxu0 %v81
      %218 = vmatpush.msra.mxu0 %v73
      %219 = vmatmul.f32.gmra.mxu0 %v121
      %v220 = vpop.f32.mrf.mxu0
      %v221 = vadd.f32 %v107, %v220
      %222 = vdwg.mxu0
      %223 = vmatpush.msra.mxu0 0.0
      %224 = vmatpush.msra.mxu0 0.0
      %225 = vmatpush.msra.mxu0 0.0
      %226 = vmatpush.msra.mxu0 0.0
      %227 = vmatpush.msra.mxu0 0.0
      %228 = vmatpush.msra.mxu0 0.0
      %229 = vmatpush.msra.mxu0 0.0
      %230 = vmatpush.msra.mxu0 0.0
      %231 = vmatpush.msra.mxu0 0.0
      %232 = vmatpush.msra.mxu0 0.0
      %233 = vmatpush.msra.mxu0 0.0
      %234 = vmatpush.msra.mxu0 0.0
      %235 = vmatpush.msra.mxu0 %v98
      %236 = vmatpush.msra.mxu0 %v90
      %237 = vmatpush.msra.mxu0 %v82
      %238 = vmatpush.msra.mxu0 %v74
      %239 = vmatmul.f32.gmra.mxu0 %v121
      %v240 = vpop.f32.mrf.mxu0
      %v241 = vadd.f32 %v108, %v240
      %242 = vdwg.mxu0
      %243 = vmatpush.msra.mxu0 0.0
      %244 = vmatpush.msra.mxu0 0.0
      %245 = vmatpush.msra.mxu0 0.0
      %246 = vmatpush.msra.mxu0 0.0
      %247 = vmatpush.msra.mxu0 0.0
      %248 = vmatpush.msra.mxu0 0.0
      %249 = vmatpush.msra.mxu0 0.0
      %250 = vmatpush.msra.mxu0 0.0
      %251 = vmatpush.msra.mxu0 0.0
      %252 = vmatpush.msra.mxu0 0.0
      %253 = vmatpush.msra.mxu0 0.0
      %254 = vmatpush.msra.mxu0 0.0
      %255 = vmatpush.msra.mxu0 %v99
      %256 = vmatpush.msra.mxu0 %v91
      %257 = vmatpush.msra.mxu0 %v83
      %258 = vmatpush.msra.mxu0 %v75
      %259 = vmatmul.f32.gmra.mxu0 %v121
      %v260 = vpop.f32.mrf.mxu0
      %v261 = vadd.f32 %v109, %v260
      %262 = vdwg.mxu0
      %263 = vmatpush.msra.mxu0 0.0
      %264 = vmatpush.msra.mxu0 0.0
      %265 = vmatpush.msra.mxu0 0.0
      %266 = vmatpush.msra.mxu0 0.0
      %267 = vmatpush.msra.mxu0 0.0
      %268 = vmatpush.msra.mxu0 0.0
      %269 = vmatpush.msra.mxu0 0.0
      %270 = vmatpush.msra.mxu0 0.0
      %271 = vmatpush.msra.mxu0 0.0
      %272 = vmatpush.msra.mxu0 0.0
      %273 = vmatpush.msra.mxu0 0.0
      %274 = vmatpush.msra.mxu0 0.0
      %275 = vmatpush.msra.mxu0 %v100
      %276 = vmatpush.msra.mxu0 %v92
      %277 = vmatpush.msra.mxu0 %v84
      %278 = vmatpush.msra.mxu0 %v76
      %279 = vmatmul.f32.gmra.mxu0 %v121
      %v280 = vpop.f32.mrf.mxu0
      %v281 = vadd.f32 %v110, %v280
      %282 = vdwg.mxu0
      %v283 = vld [vmem:[%s3] sm:$0xff]
      %v284 = vld [vmem:[%s3 + $0x8] sm:$0xff]
      %v285 = vld [vmem:[%s3 + $0x10] sm:$0xff]
      %v286 = vld [vmem:[%s3 + $0x18] sm:$0xff]
      %v287 = vld [vmem:[%s3 + $0x20] sm:$0xff]
      %v288 = vld [vmem:[%s3 + $0x28] sm:$0xff]
      %v289 = vld [vmem:[%s3 + $0x30] sm:$0xff]
      %v290 = vld [vmem:[%s3 + $0x38] sm:$0xff]
      %v291 = vld [vmem:[%s3 + $0x40] sm:$0xff]
      %v292 = vld [vmem:[%s3 + $0x48] sm:$0xff]
      %v293 = vld [vmem:[%s3 + $0x50] sm:$0xff]
      %v294 = vld [vmem:[%s3 + $0x58] sm:$0xff]
      %v295 = vld [vmem:[%s3 + $0x60] sm:$0xff]
      %v296 = vld [vmem:[%s3 + $0x68] sm:$0xff]
      %v297 = vld [vmem:[%s3 + $0x70] sm:$0xff]
      %v298 = vld [vmem:[%s3 + $0x78] sm:$0xff]
      %v299 = vld [vmem:[%s4] sm:$0x1]
      %v301 = vperm.slane %v299, 0
      %303 = vmatpush.msra.mxu0 %v298
      %304 = vmatpush.msra.mxu0 %v297
      %305 = vmatpush.msra.mxu0 %v296
      %306 = vmatpush.msra.mxu0 %v295
      %307 = vmatpush.msra.mxu0 %v294
      %308 = vmatpush.msra.mxu0 %v293
      %309 = vmatpush.msra.mxu0 %v292
      %310 = vmatpush.msra.mxu0 %v291
      %311 = vmatpush.msra.mxu0 %v290
      %312 = vmatpush.msra.mxu0 %v289
      %313 = vmatpush.msra.mxu0 %v288
      %314 = vmatpush.msra.mxu0 %v287
      %315 = vmatpush.msra.mxu0 %v286
      %316 = vmatpush.msra.mxu0 %v285
      %317 = vmatpush.msra.mxu0 %v284
      %318 = vmatpush.msra.mxu0 %v283
      %319 = vmatmul.f32.gmra.mxu0 %v141
      %v320 = vpop.f32.mrf.mxu0
      %v321 = vadd.f32 %v301, %v320
      %322 = vdwg.mxu0
      %vm323 = vcmask 254976
      %324 = vst.msk [vmem:[#allocation3] sm:$0x3] %vm323, %v321
      %s325 = scalar_lea.vmem %s3, 128
      %v326 = vld [vmem:[%s325] sm:$0xff]
      %v327 = vld [vmem:[%s325 + $0x8] sm:$0xff]
      %v328 = vld [vmem:[%s325 + $0x10] sm:$0xff]
      %v329 = vld [vmem:[%s325 + $0x18] sm:$0xff]
      %v330 = vld [vmem:[%s325 + $0x20] sm:$0xff]
      %v331 = vld [vmem:[%s325 + $0x28] sm:$0xff]
      %v332 = vld [vmem:[%s325 + $0x30] sm:$0xff]
      %v333 = vld [vmem:[%s325 + $0x38] sm:$0xff]
      %v334 = vld [vmem:[%s325 + $0x40] sm:$0xff]
      %v335 = vld [vmem:[%s325 + $0x48] sm:$0xff]
      %v336 = vld [vmem:[%s325 + $0x50] sm:$0xff]
      %v337 = vld [vmem:[%s325 + $0x58] sm:$0xff]
      %v338 = vld [vmem:[%s325 + $0x60] sm:$0xff]
      %v339 = vld [vmem:[%s325 + $0x68] sm:$0xff]
      %v340 = vld [vmem:[%s325 + $0x70] sm:$0xff]
      %v341 = vld [vmem:[%s325 + $0x78] sm:$0xff]
      %s342 = scalar_lea.vmem %s4, 1
      %v343 = vld [vmem:[%s342] sm:$0x1]
      %v345 = vperm.slane %v343, 0
      %347 = vmatpush.msra.mxu0 %v341
      %348 = vmatpush.msra.mxu0 %v340
      %349 = vmatpush.msra.mxu0 %v339
      %350 = vmatpush.msra.mxu0 %v338
      %351 = vmatpush.msra.mxu0 %v337
      %352 = vmatpush.msra.mxu0 %v336
      %353 = vmatpush.msra.mxu0 %v335
      %354 = vmatpush.msra.mxu0 %v334
      %355 = vmatpush.msra.mxu0 %v333
      %356 = vmatpush.msra.mxu0 %v332
      %357 = vmatpush.msra.mxu0 %v331
      %358 = vmatpush.msra.mxu0 %v330
      %359 = vmatpush.msra.mxu0 %v329
      %360 = vmatpush.msra.mxu0 %v328
      %361 = vmatpush.msra.mxu0 %v327
      %362 = vmatpush.msra.mxu0 %v326
      %363 = vmatmul.f32.gmra.mxu0 %v161
      %v364 = vpop.f32.mrf.mxu0
      %v365 = vadd.f32 %v345, %v364
      %366 = vdwg.mxu0
      %s367 = scalar_lea.vmem [#allocation3], 2
      %368 = vst.msk [vmem:[%s367] sm:$0x3] %vm323, %v365
      %s369 = scalar_lea.vmem %s3, 256
      %v370 = vld [vmem:[%s369] sm:$0xff]
      %v371 = vld [vmem:[%s369 + $0x8] sm:$0xff]
      %v372 = vld [vmem:[%s369 + $0x10] sm:$0xff]
      %v373 = vld [vmem:[%s369 + $0x18] sm:$0xff]
      %v374 = vld [vmem:[%s369 + $0x20] sm:$0xff]
      %v375 = vld [vmem:[%s369 + $0x28] sm:$0xff]
      %v376 = vld [vmem:[%s369 + $0x30] sm:$0xff]
      %v377 = vld [vmem:[%s369 + $0x38] sm:$0xff]
      %v378 = vld [vmem:[%s369 + $0x40] sm:$0xff]
      %v379 = vld [vmem:[%s369 + $0x48] sm:$0xff]
      %v380 = vld [vmem:[%s369 + $0x50] sm:$0xff]
      %v381 = vld [vmem:[%s369 + $0x58] sm:$0xff]
      %v382 = vld [vmem:[%s369 + $0x60] sm:$0xff]
      %v383 = vld [vmem:[%s369 + $0x68] sm:$0xff]
      %v384 = vld [vmem:[%s369 + $0x70] sm:$0xff]
      %v385 = vld [vmem:[%s369 + $0x78] sm:$0xff]
      %s386 = scalar_lea.vmem %s4, 2
      %v387 = vld [vmem:[%s386] sm:$0x1]
      %v389 = vperm.slane %v387, 0
      %391 = vmatpush.msra.mxu0 %v385
      %392 = vmatpush.msra.mxu0 %v384
      %393 = vmatpush.msra.mxu0 %v383
      %394 = vmatpush.msra.mxu0 %v382
      %395 = vmatpush.msra.mxu0 %v381
      %396 = vmatpush.msra.mxu0 %v380
      %397 = vmatpush.msra.mxu0 %v379
      %398 = vmatpush.msra.mxu0 %v378
      %399 = vmatpush.msra.mxu0 %v377
      %400 = vmatpush.msra.mxu0 %v376
      %401 = vmatpush.msra.mxu0 %v375
      %402 = vmatpush.msra.mxu0 %v374
      %403 = vmatpush.msra.mxu0 %v373
      %404 = vmatpush.msra.mxu0 %v372
      %405 = vmatpush.msra.mxu0 %v371
      %406 = vmatpush.msra.mxu0 %v370
      %407 = vmatmul.f32.gmra.mxu0 %v181
      %v408 = vpop.f32.mrf.mxu0
      %v409 = vadd.f32 %v389, %v408
      %410 = vdwg.mxu0
      %s411 = scalar_lea.vmem [#allocation3], 4
      %412 = vst.msk [vmem:[%s411] sm:$0x3] %vm323, %v409
      %s413 = scalar_lea.vmem %s3, 384
      %v414 = vld [vmem:[%s413] sm:$0xff]
      %v415 = vld [vmem:[%s413 + $0x8] sm:$0xff]
      %v416 = vld [vmem:[%s413 + $0x10] sm:$0xff]
      %v417 = vld [vmem:[%s413 + $0x18] sm:$0xff]
      %v418 = vld [vmem:[%s413 + $0x20] sm:$0xff]
      %v419 = vld [vmem:[%s413 + $0x28] sm:$0xff]
      %v420 = vld [vmem:[%s413 + $0x30] sm:$0xff]
      %v421 = vld [vmem:[%s413 + $0x38] sm:$0xff]
      %v422 = vld [vmem:[%s413 + $0x40] sm:$0xff]
      %v423 = vld [vmem:[%s413 + $0x48] sm:$0xff]
      %v424 = vld [vmem:[%s413 + $0x50] sm:$0xff]
      %v425 = vld [vmem:[%s413 + $0x58] sm:$0xff]
      %v426 = vld [vmem:[%s413 + $0x60] sm:$0xff]
      %v427 = vld [vmem:[%s413 + $0x68] sm:$0xff]
      %v428 = vld [vmem:[%s413 + $0x70] sm:$0xff]
      %v429 = vld [vmem:[%s413 + $0x78] sm:$0xff]
      %s430 = scalar_lea.vmem %s4, 3
      %v431 = vld [vmem:[%s430] sm:$0x1]
      %v433 = vperm.slane %v431, 0
      %435 = vmatpush.msra.mxu0 %v429
      %436 = vmatpush.msra.mxu0 %v428
      %437 = vmatpush.msra.mxu0 %v427
      %438 = vmatpush.msra.mxu0 %v426
      %439 = vmatpush.msra.mxu0 %v425
      %440 = vmatpush.msra.mxu0 %v424
      %441 = vmatpush.msra.mxu0 %v423
      %442 = vmatpush.msra.mxu0 %v422
      %443 = vmatpush.msra.mxu0 %v421
      %444 = vmatpush.msra.mxu0 %v420
      %445 = vmatpush.msra.mxu0 %v419
      %446 = vmatpush.msra.mxu0 %v418
      %447 = vmatpush.msra.mxu0 %v417
      %448 = vmatpush.msra.mxu0 %v416
      %449 = vmatpush.msra.mxu0 %v415
      %450 = vmatpush.msra.mxu0 %v414
      %451 = vmatmul.f32.gmra.mxu0 %v201
      %v452 = vpop.f32.mrf.mxu0
      %v453 = vadd.f32 %v433, %v452
      %454 = vdwg.mxu0
      %s455 = scalar_lea.vmem [#allocation3], 6
      %456 = vst.msk [vmem:[%s455] sm:$0x3] %vm323, %v453
      %s457 = scalar_lea.vmem %s3, 512
      %v458 = vld [vmem:[%s457] sm:$0xff]
      %v459 = vld [vmem:[%s457 + $0x8] sm:$0xff]
      %v460 = vld [vmem:[%s457 + $0x10] sm:$0xff]
      %v461 = vld [vmem:[%s457 + $0x18] sm:$0xff]
      %v462 = vld [vmem:[%s457 + $0x20] sm:$0xff]
      %v463 = vld [vmem:[%s457 + $0x28] sm:$0xff]
      %v464 = vld [vmem:[%s457 + $0x30] sm:$0xff]
      %v465 = vld [vmem:[%s457 + $0x38] sm:$0xff]
      %v466 = vld [vmem:[%s457 + $0x40] sm:$0xff]
      %v467 = vld [vmem:[%s457 + $0x48] sm:$0xff]
      %v468 = vld [vmem:[%s457 + $0x50] sm:$0xff]
      %v469 = vld [vmem:[%s457 + $0x58] sm:$0xff]
      %v470 = vld [vmem:[%s457 + $0x60] sm:$0xff]
      %v471 = vld [vmem:[%s457 + $0x68] sm:$0xff]
      %v472 = vld [vmem:[%s457 + $0x70] sm:$0xff]
      %v473 = vld [vmem:[%s457 + $0x78] sm:$0xff]
      %s474 = scalar_lea.vmem %s4, 4
      %v475 = vld [vmem:[%s474] sm:$0x1]
      %v477 = vperm.slane %v475, 0
      %479 = vmatpush.msra.mxu0 %v473
      %480 = vmatpush.msra.mxu0 %v472
      %481 = vmatpush.msra.mxu0 %v471
      %482 = vmatpush.msra.mxu0 %v470
      %483 = vmatpush.msra.mxu0 %v469
      %484 = vmatpush.msra.mxu0 %v468
      %485 = vmatpush.msra.mxu0 %v467
      %486 = vmatpush.msra.mxu0 %v466
      %487 = vmatpush.msra.mxu0 %v465
      %488 = vmatpush.msra.mxu0 %v464
      %489 = vmatpush.msra.mxu0 %v463
      %490 = vmatpush.msra.mxu0 %v462
      %491 = vmatpush.msra.mxu0 %v461
      %492 = vmatpush.msra.mxu0 %v460
      %493 = vmatpush.msra.mxu0 %v459
      %494 = vmatpush.msra.mxu0 %v458
      %495 = vmatmul.f32.gmra.mxu0 %v221
      %v496 = vpop.f32.mrf.mxu0
      %v497 = vadd.f32 %v477, %v496
      %498 = vdwg.mxu0
      %s499 = scalar_lea.vmem [#allocation3], 8
      %500 = vst.msk [vmem:[%s499] sm:$0x3] %vm323, %v497
      %s501 = scalar_lea.vmem %s3, 640
      %v502 = vld [vmem:[%s501] sm:$0xff]
      %v503 = vld [vmem:[%s501 + $0x8] sm:$0xff]
      %v504 = vld [vmem:[%s501 + $0x10] sm:$0xff]
      %v505 = vld [vmem:[%s501 + $0x18] sm:$0xff]
      %v506 = vld [vmem:[%s501 + $0x20] sm:$0xff]
      %v507 = vld [vmem:[%s501 + $0x28] sm:$0xff]
      %v508 = vld [vmem:[%s501 + $0x30] sm:$0xff]
      %v509 = vld [vmem:[%s501 + $0x38] sm:$0xff]
      %v510 = vld [vmem:[%s501 + $0x40] sm:$0xff]
      %v511 = vld [vmem:[%s501 + $0x48] sm:$0xff]
      %v512 = vld [vmem:[%s501 + $0x50] sm:$0xff]
      %v513 = vld [vmem:[%s501 + $0x58] sm:$0xff]
      %v514 = vld [vmem:[%s501 + $0x60] sm:$0xff]
      %v515 = vld [vmem:[%s501 + $0x68] sm:$0xff]
      %v516 = vld [vmem:[%s501 + $0x70] sm:$0xff]
      %v517 = vld [vmem:[%s501 + $0x78] sm:$0xff]
      %s518 = scalar_lea.vmem %s4, 5
      %v519 = vld [vmem:[%s518] sm:$0x1]
      %v521 = vperm.slane %v519, 0
      %523 = vmatpush.msra.mxu0 %v517
      %524 = vmatpush.msra.mxu0 %v516
      %525 = vmatpush.msra.mxu0 %v515
      %526 = vmatpush.msra.mxu0 %v514
      %527 = vmatpush.msra.mxu0 %v513
      %528 = vmatpush.msra.mxu0 %v512
      %529 = vmatpush.msra.mxu0 %v511
      %530 = vmatpush.msra.mxu0 %v510
      %531 = vmatpush.msra.mxu0 %v509
      %532 = vmatpush.msra.mxu0 %v508
      %533 = vmatpush.msra.mxu0 %v507
      %534 = vmatpush.msra.mxu0 %v506
      %535 = vmatpush.msra.mxu0 %v505
      %536 = vmatpush.msra.mxu0 %v504
      %537 = vmatpush.msra.mxu0 %v503
      %538 = vmatpush.msra.mxu0 %v502
      %539 = vmatmul.f32.gmra.mxu0 %v241
      %v540 = vpop.f32.mrf.mxu0
      %v541 = vadd.f32 %v521, %v540
      %542 = vdwg.mxu0
      %s543 = scalar_lea.vmem [#allocation3], 10
      %544 = vst.msk [vmem:[%s543] sm:$0x3] %vm323, %v541
      %s545 = scalar_lea.vmem %s3, 768
      %v546 = vld [vmem:[%s545] sm:$0xff]
      %v547 = vld [vmem:[%s545 + $0x8] sm:$0xff]
      %v548 = vld [vmem:[%s545 + $0x10] sm:$0xff]
      %v549 = vld [vmem:[%s545 + $0x18] sm:$0xff]
      %v550 = vld [vmem:[%s545 + $0x20] sm:$0xff]
      %v551 = vld [vmem:[%s545 + $0x28] sm:$0xff]
      %v552 = vld [vmem:[%s545 + $0x30] sm:$0xff]
      %v553 = vld [vmem:[%s545 + $0x38] sm:$0xff]
      %v554 = vld [vmem:[%s545 + $0x40] sm:$0xff]
      %v555 = vld [vmem:[%s545 + $0x48] sm:$0xff]
      %v556 = vld [vmem:[%s545 + $0x50] sm:$0xff]
      %v557 = vld [vmem:[%s545 + $0x58] sm:$0xff]
      %v558 = vld [vmem:[%s545 + $0x60] sm:$0xff]
      %v559 = vld [vmem:[%s545 + $0x68] sm:$0xff]
      %v560 = vld [vmem:[%s545 + $0x70] sm:$0xff]
      %v561 = vld [vmem:[%s545 + $0x78] sm:$0xff]
      %s562 = scalar_lea.vmem %s4, 6
      %v563 = vld [vmem:[%s562] sm:$0x1]
      %v565 = vperm.slane %v563, 0
      %567 = vmatpush.msra.mxu0 %v561
      %568 = vmatpush.msra.mxu0 %v560
      %569 = vmatpush.msra.mxu0 %v559
      %570 = vmatpush.msra.mxu0 %v558
      %571 = vmatpush.msra.mxu0 %v557
      %572 = vmatpush.msra.mxu0 %v556
      %573 = vmatpush.msra.mxu0 %v555
      %574 = vmatpush.msra.mxu0 %v554
      %575 = vmatpush.msra.mxu0 %v553
      %576 = vmatpush.msra.mxu0 %v552
      %577 = vmatpush.msra.mxu0 %v551
      %578 = vmatpush.msra.mxu0 %v550
      %579 = vmatpush.msra.mxu0 %v549
      %580 = vmatpush.msra.mxu0 %v548
      %581 = vmatpush.msra.mxu0 %v547
      %582 = vmatpush.msra.mxu0 %v546
      %583 = vmatmul.f32.gmra.mxu0 %v261
      %v584 = vpop.f32.mrf.mxu0
      %v585 = vadd.f32 %v565, %v584
      %586 = vdwg.mxu0
      %s587 = scalar_lea.vmem [#allocation3], 12
      %588 = vst.msk [vmem:[%s587] sm:$0x3] %vm323, %v585
      %s589 = scalar_lea.vmem %s3, 896
      %v590 = vld [vmem:[%s589] sm:$0xff]
      %v591 = vld [vmem:[%s589 + $0x8] sm:$0xff]
      %v592 = vld [vmem:[%s589 + $0x10] sm:$0xff]
      %v593 = vld [vmem:[%s589 + $0x18] sm:$0xff]
      %v594 = vld [vmem:[%s589 + $0x20] sm:$0xff]
      %v595 = vld [vmem:[%s589 + $0x28] sm:$0xff]
      %v596 = vld [vmem:[%s589 + $0x30] sm:$0xff]
      %v597 = vld [vmem:[%s589 + $0x38] sm:$0xff]
      %v598 = vld [vmem:[%s589 + $0x40] sm:$0xff]
      %v599 = vld [vmem:[%s589 + $0x48] sm:$0xff]
      %v600 = vld [vmem:[%s589 + $0x50] sm:$0xff]
      %v601 = vld [vmem:[%s589 + $0x58] sm:$0xff]
      %v602 = vld [vmem:[%s589 + $0x60] sm:$0xff]
      %v603 = vld [vmem:[%s589 + $0x68] sm:$0xff]
      %v604 = vld [vmem:[%s589 + $0x70] sm:$0xff]
      %v605 = vld [vmem:[%s589 + $0x78] sm:$0xff]
      %s606 = scalar_lea.vmem %s4, 7
      %v607 = vld [vmem:[%s606] sm:$0x1]
      %v609 = vperm.slane %v607, 0
      %611 = vmatpush.msra.mxu0 %v605
      %612 = vmatpush.msra.mxu0 %v604
      %613 = vmatpush.msra.mxu0 %v603
      %614 = vmatpush.msra.mxu0 %v602
      %615 = vmatpush.msra.mxu0 %v601
      %616 = vmatpush.msra.mxu0 %v600
      %617 = vmatpush.msra.mxu0 %v599
      %618 = vmatpush.msra.mxu0 %v598
      %619 = vmatpush.msra.mxu0 %v597
      %620 = vmatpush.msra.mxu0 %v596
      %621 = vmatpush.msra.mxu0 %v595
      %622 = vmatpush.msra.mxu0 %v594
      %623 = vmatpush.msra.mxu0 %v593
      %624 = vmatpush.msra.mxu0 %v592
      %625 = vmatpush.msra.mxu0 %v591
      %626 = vmatpush.msra.mxu0 %v590
      %627 = vmatmul.f32.gmra.mxu0 %v281
      %v628 = vpop.f32.mrf.mxu0
      %v629 = vadd.f32 %v609, %v628
      %630 = vdwg.mxu0
      %s631 = scalar_lea.vmem [#allocation3], 14
      %632 = vst.msk [vmem:[%s631] sm:$0x3] %vm323, %v629
    $region29: #{tpu_custom_call.1} parent=1 // pred_fallthru
      _
    // Predicated region
    $region30: #{tpu_custom_call.1} parent=1 // pred_check
      _
    $region31: #{tpu_custom_call.1} parent=1 // pred_check_branch
      %634 = sbr.rel (0) target = $region33
    $region32: #{tpu_custom_call.1} parent=1 // pred_region
      %636 = vsyncadd [#allocation4], 0
      %s637 = sshll.u32 [#allocation3], 4
      %s638 = int_to_ptr.vmem [resolvable:$true] %s637
      %s639 = sshll.u32 %s5, 4
      %s640 = int_to_ptr.hbm [resolvable:$true] %s639
      %645 = dma.vmem_to_hbm [thread:$0]  %s638, 256, %s640, [#allocation4], 32, 32, 2
    $region33: #{tpu_custom_call.1} parent=1 // pred_fallthru
      _
    // Predicated region
    $region34: #{tpu_custom_call.1} parent=1 // pred_check
      _
    $region35: #{tpu_custom_call.1} parent=1 // pred_check_branch
      %647 = sbr.rel (0) target = $region37
    $region36: #{tpu_custom_call.1} parent=1 // pred_region
      %649 = dma.done [#allocation4], 256
    $region37: #{tpu_custom_call.1} parent=1 // pred_fallthru
      _
    %650 = vsyncpa [#allocation4], 1

</llo_original>
